<compile_context>
chip_gen: v7x
topology: tpu7x:2x2x1
jax: 0.10.0
libtpu: 0.0.40
codegen_flags: <defaults>
</compile_context>

<pallas_src>
import functools

import jax
import jax.numpy as jnp
from jax import lax
from jax.experimental import pallas as pl
from jax.experimental.pallas import tpu as pltpu

HIDDEN_SIZE = 768  # fixed by the module (self.hidden_size = 768)


# ----------------------------- tiling helpers -----------------------------

def _sublane_align(dtype) -> int:
    """Sublane alignment for the second-to-last block dim, by element size."""
    itemsize = jnp.dtype(dtype).itemsize
    return {4: 8, 2: 16, 1: 32}.get(itemsize, 8)


def _round_down(x: int, m: int) -> int:
    return (x // m) * m


def _aligned_divisors(extent: int, align: int):
    return [d for d in range(align, extent + 1, align) if extent % d == 0]


def _vmem_capacity_bytes() -> int:
    """Per-TensorCore VMEM capacity; conservative fallback if unqueryable."""
    try:
        return int(pltpu.get_tpu_info().vmem_capacity_bytes)
    except Exception:
        return 64 << 20  # v7x per-TC VMEM (smallest modern part) -> safe everywhere


def _choose_batch_tile(B: int, align: int) -> int:
    """Pick the batch tile: aligned divisor of B (or full B), preferring a
    grid with >= 2 programs on the 'parallel' axis so v7x megacore is used."""
    divs = _aligned_divisors(B, align)
    if not divs:
        return B  # full extent: always a legal block dim (e.g. B=2)
    cap = 4 * align  # accumulator is only (tb, 768) f32 -> keep tb small
    cand = [d for d in divs if d <= cap]
    tb = max(cand) if cand else min(divs)
    if B // tb < 2:
        halves = [d for d in divs if B // d >= 2]
        if halves:
            tb = max(halves)
    # TODO(synk): for genuinely small B (B < 2*align) the parallel axis has a
    # single program; splitting S across the two v7x cores with a tiny combine
    # epilogue would recover the idle TensorCore.
    return tb


def _choose_seq_tile(S: int, align: int, rows_cap: int) -> int:
    if S <= rows_cap:
        return S  # single S block; full extent is always legal
    return max(align, _round_down(rows_cap, align))


# --------------------------------- kernel ---------------------------------

def _avg_pool_kernel(x_ref, o_ref, acc_ref, *, inv_s: float, ts: int,
                     s_total: int, s_ragged: bool):
    # x_ref:  (TB, TS, H) input tile in VMEM
    # o_ref:  (TB, H) output tile (same block across the S grid axis)
    # acc_ref:(TB, H) f32 accumulator scratch, persists across grid steps
    k = pl.program_id(1)

    x = x_ref[...]
    if s_ragged:
        # Mask the padded tail of the final (partial) S-chunk.
        rem = s_total - k * ts  # valid rows in this chunk (>= ts except last)
        row = lax.broadcasted_iota(jnp.int32, x_ref.shape, 1)
        x = jnp.where(row < rem, x, jnp.zeros_like(x))

    # Partial sum over this S-chunk, accumulated in f32.
    partial = jnp.sum(x, axis=1, dtype=jnp.float32)

    @pl.when(k == 0)
    def _():
        acc_ref[...] = partial          # write-through: no zero-fill pass

    @pl.when(k != 0)
    def _():
        acc_ref[...] += partial

    @pl.when(k == pl.num_programs(1) - 1)
    def _():
        # Scale by 1/S_total (compile-time constant of the FULL S), cast once.
        o_ref[...] = (acc_ref[...] * inv_s).astype(o_ref.dtype)


# -------------------------------- wrapper ---------------------------------

def avg_pooler(hidden_states: jax.Array,
               *,
               max_tile_bytes: int | None = None,
               vmem_limit_cap_bytes: int | None = None) -> jax.Array:
    """JAX/Pallas equivalent of AvgPooler.forward.

    hidden_states: (B, S, HIDDEN_SIZE)  ->  (B, HIDDEN_SIZE)
    """
    B, S, H = hidden_states.shape
    assert H == HIDDEN_SIZE, "AdaptiveAvgPool2d((1, 768)) expects width == 768"

    dtype = hidden_states.dtype
    itemsize = jnp.dtype(dtype).itemsize
    align = _sublane_align(dtype)

    # --- chip-aware VMEM budget -------------------------------------------
    vmem_cap = _vmem_capacity_bytes()
    if vmem_limit_cap_bytes is None:
        # ~56 MiB on 64 MiB parts (v7x), capped at 100 MiB on 128 MiB parts.
        vmem_limit_cap_bytes = min((vmem_cap * 7) // 8, 100 << 20)
    if max_tile_bytes is None:
        # Double-buffered input tile is the dominant consumer; ~16 MiB keeps
        # per-grid-step overhead (~0.35 us) well under the DMA time on v7x
        # while fitting comfortably inside the scoped limit on every gen.
        max_tile_bytes = min(16 << 20,
                             max(4 << 20, (vmem_limit_cap_bytes - (8 << 20)) // 2))

    # --- tile selection ------------------------------------------------------
    tb = _choose_batch_tile(B, align)

    rows_cap = max(1, max_tile_bytes // max(1, tb * H * itemsize))
    ts = _choose_seq_tile(S, align, rows_cap)
    grid_s = pl.cdiv(S, ts)
    s_ragged = (S % ts) != 0  # masked cdiv tiling handles the partial chunk

    grid = (B // tb, grid_s)

    # --- vmem limit tied to the actual buffer footprint ---------------------
    tile_bytes = tb * ts * H * itemsize
    out_bytes = tb * H * itemsize
    acc_bytes = tb * H * 4
    vmem_limit = 2 * tile_bytes + 2 * out_bytes + acc_bytes + (8 << 20)
    vmem_limit = max(16 << 20, min(vmem_limit, vmem_limit_cap_bytes))

    kernel = functools.partial(
        _avg_pool_kernel, inv_s=1.0 / S, ts=ts, s_total=S, s_ragged=s_ragged)

    cost = pl.CostEstimate(
        flops=int(B) * int(S) * int(H),
        transcendentals=0,
        bytes_accessed=(int(B) * int(S) * int(H) + int(B) * int(H)) * itemsize,
    )

    return pl.pallas_call(
        kernel,
        out_shape=jax.ShapeDtypeStruct((B, H), dtype),
        grid=grid,
        in_specs=[pl.BlockSpec((tb, ts, H), lambda b, k: (b, k, 0))],
        # Same output block for every k -> resident accumulator-style output.
        out_specs=pl.BlockSpec((tb, H), lambda b, k: (b, 0)),
        scratch_shapes=[pltpu.VMEM((tb, H), jnp.float32)],
        compiler_params=pltpu.CompilerParams(
            dimension_semantics=("parallel", "arbitrary"),
            vmem_limit_bytes=int(vmem_limit),
        ),
        cost_estimate=cost,
    )(hidden_states)


def _reference(hidden_states: jax.Array) -> jax.Array:
    # Pure-JAX reference of AdaptiveAvgPool2d((1, 768)) + view(-1, 768).
    return jnp.mean(
        hidden_states.astype(jnp.float32), axis=1
    ).astype(hidden_states.dtype)


if __name__ == "__main__":
    key = jax.random.PRNGKey(0)
    k1, k2 = jax.random.split(key)

    # Case 1: small shape consistent with the module (B=2, S=8, H=768).
    x_small = jax.random.normal(k1, (2, 8, HIDDEN_SIZE), dtype=jnp.float32)
    out_small = avg_pooler(x_small)
    jax.block_until_ready(out_small)
    ref_small = _reference(x_small)
    assert out_small.shape == (2, HIDDEN_SIZE), out_small.shape
    assert jnp.allclose(out_small, ref_small, atol=1e-5, rtol=1e-5), \
        "mismatch vs reference (small)"

    # Case 2: tiny tile budget forces the masked ragged-S reduction grid
    # (S=200 with ts=16 -> 13 chunks, last one partial and masked).
    x_rag = jax.random.normal(k2, (4, 200, HIDDEN_SIZE), dtype=jnp.float32)
    out_rag = avg_pooler(x_rag, max_tile_bytes=256 * 1024)
    jax.block_until_ready(out_rag)
    ref_rag = _reference(x_rag)
    assert out_rag.shape == (4, HIDDEN_SIZE), out_rag.shape
    assert jnp.allclose(out_rag, ref_rag, atol=1e-5, rtol=1e-5), \
        "mismatch vs reference (ragged tiled)"

    print("KERNEL_OK")
</pallas_src>

<mosaic_0001>
module attributes {stable_mosaic.version = 11 : i64} {
  func.func @_avg_pool_kernel(%arg0: i32, %arg1: i32, %arg2: memref<2x8x768xf32, #tpu.memory_space<vmem>>, %arg3: memref<2x768xf32, #tpu.memory_space<vmem>>, %arg4: memref<2x768xf32, #tpu.memory_space<vmem>>) attributes {dimension_semantics = [#tpu.dimension_semantics<parallel>, #tpu.dimension_semantics<arbitrary>], iteration_bounds = array<i64: 1, 1>, scalar_prefetch = 0 : i64, scratch_operands = 1 : i64, tpu.core_type = #tpu.core_type<tc>, window_params = [{transform_indices = @transform_0, window_bounds = array<i64: 2, 8, 768>}, {transform_indices = @transform_1, window_bounds = array<i64: 2, 768>}]} {
    %c0 = arith.constant 0 : index
    %c0_0 = arith.constant 0 : index
    %c0_1 = arith.constant 0 : index
    %0 = vector.load %arg2[%c0, %c0_0, %c0_1] : memref<2x8x768xf32, #tpu.memory_space<vmem>>, vector<2x8x768xf32>
    %cst = arith.constant dense<0.000000e+00> : vector<2x768xf32>
    %1 = vector.multi_reduction <add>, %0, %cst [1] : vector<2x8x768xf32> to vector<2x768xf32>
    %c0_i32 = arith.constant 0 : i32
    %2 = arith.cmpi eq, %arg1, %c0_i32 : i32
    %3 = arith.extui %2 : i1 to i32
    %c0_i32_2 = arith.constant 0 : i32
    %4 = arith.cmpi ne, %3, %c0_i32_2 : i32
    scf.if %4 {
      %c0_7 = arith.constant 0 : index
      %c0_8 = arith.constant 0 : index
      %11 = vector.load %arg4[%c0_7, %c0_8] : memref<2x768xf32, #tpu.memory_space<vmem>>, vector<2x768xf32>
      tpu.vector_store %arg4[%c0_7, %c0_8], %1 {strides = array<i32>} : memref<2x768xf32, #tpu.memory_space<vmem>>, vector<2x768xf32>,
    } else {
    }
    %c0_i32_3 = arith.constant 0 : i32
    %5 = arith.cmpi ne, %arg1, %c0_i32_3 : i32
    %6 = arith.extui %5 : i1 to i32
    %c0_i32_4 = arith.constant 0 : i32
    %7 = arith.cmpi ne, %6, %c0_i32_4 : i32
    scf.if %7 {
      %c0_7 = arith.constant 0 : index
      %c0_8 = arith.constant 0 : index
      %11 = vector.load %arg4[%c0_7, %c0_8] : memref<2x768xf32, #tpu.memory_space<vmem>>, vector<2x768xf32>
      %12 = arith.addf %11, %1 : vector<2x768xf32>
      %c0_9 = arith.constant 0 : index
      %c0_10 = arith.constant 0 : index
      %13 = vector.load %arg4[%c0_9, %c0_10] : memref<2x768xf32, #tpu.memory_space<vmem>>, vector<2x768xf32>
      tpu.vector_store %arg4[%c0_9, %c0_10], %12 {strides = array<i32>} : memref<2x768xf32, #tpu.memory_space<vmem>>, vector<2x768xf32>,
    } else {
    }
    %c0_i32_5 = arith.constant 0 : i32
    %8 = arith.cmpi eq, %arg1, %c0_i32_5 : i32
    %9 = arith.extui %8 : i1 to i32
    %c0_i32_6 = arith.constant 0 : i32
    %10 = arith.cmpi ne, %9, %c0_i32_6 : i32
    scf.if %10 {
      %c0_7 = arith.constant 0 : index
      %c0_8 = arith.constant 0 : index
      %11 = vector.load %arg4[%c0_7, %c0_8] : memref<2x768xf32, #tpu.memory_space<vmem>>, vector<2x768xf32>
      %cst_9 = arith.constant 1.250000e-01 : f32
      %12 = vector.broadcast %cst_9 : f32 to vector<2x768xf32>
      %13 = arith.mulf %11, %12 : vector<2x768xf32>
      %c0_10 = arith.constant 0 : index
      %c0_11 = arith.constant 0 : index
      %14 = vector.load %arg3[%c0_10, %c0_11] : memref<2x768xf32, #tpu.memory_space<vmem>>, vector<2x768xf32>
      tpu.vector_store %arg3[%c0_10, %c0_11], %13 {strides = array<i32>} : memref<2x768xf32, #tpu.memory_space<vmem>>, vector<2x768xf32>,
    } else {
    }
    return
  }
  func.func @transform_0(%arg0: i32, %arg1: i32) -> (i32, i32, i32) {
    %c0_i32 = arith.constant 0 : i32
    %c0_i32_0 = arith.constant 0 : i32
    return %arg0, %arg1, %c0_i32 : i32, i32, i32
  }
  func.func @transform_1(%arg0: i32, %arg1: i32) -> (i32, i32) {
    %c0_i32 = arith.constant 0 : i32
    %c0_i32_0 = arith.constant 0 : i32
    return %arg0, %c0_i32 : i32, i32
  }
}

</mosaic_0001>

<llo_original>
// kernel: tpu_custom_call.1
$region0: #{tpu_custom_call.1}
  #allocation0 [shape = 'u32[]', space=smem, size = 0x4, offset = 0x4, fixed_abs, tag = 'smem constant byte address 0x4 - core index']
  #allocation1 [shape = 'u32[144,128]{1,0:T(1,128)}', space=vmem, size = 0x12000, scoped, tag = 'internal scratch']
  #allocation2 [shape = 'f32[2,768]{1,0:T(2,128)}', space=vmem, size = 0x1800, scoped, tag = 'scratch operand']
  %s0 = inlined_call_operand.hbm [shape: f32[2,8,768], index: 0, kind: input, shape index: {}]
  %s1 = inlined_call_operand.hbm [shape: f32[2,768], index: 1, kind: output, shape index: {}]
  %s2 = sld [smem:[#allocation0]]
  $region30: #{tpu_custom_call.1} parent=0
    _
  %s4 = ssub.s32 1, %s2
  %s5 = scalar_select 0, %s4, %s2
  $region1: #{tpu_custom_call.1} parent=0
    #allocation3 [shape = 'u8[49152]{0}', space=vmem, size = 0xc000, scoped, tag = 'input window, operand 0, single buffered']
    #allocation4 [shape = 's32[1]{0}', space=sflag, size = 0x4, scoped, tag = 'scoped memory for tpu_custom_call.1']
    #allocation5 [shape = 's32[1]{0}', space=sflag, size = 0x4, scoped, tag = 'scoped memory for tpu_custom_call.1']
    #allocation6 [shape = 'u8[6144]{0}', space=vmem, size = 0x1800, scoped, tag = 'output window, operand 0, single buffered']
    %6 = vsyncpa [#allocation4], 0
    %7 = vsyncpa [#allocation5], 0
    // Predicated region
    $region2: #{tpu_custom_call.1} parent=1 // pred_check
      _
    $region3: #{tpu_custom_call.1} parent=1 // pred_check_branch
      %9 = sbr.rel (0) target = $region5
    $region4: #{tpu_custom_call.1} parent=1 // pred_region
      %s11 = ssub.s32 1536, 1536
      %12 = vsyncadd [#allocation4], %s11
      %s13 = sshll.u32 [#allocation3], 4
      %s14 = int_to_ptr.vmem [resolvable:$true] %s13
      %19 = dma.hbm_to_vmem [thread:$0]  %s0, 1536, %s14, [#allocation4], 768, 768, 48
    $region5: #{tpu_custom_call.1} parent=1 // pred_fallthru
      _
    // Predicated region
    $region6: #{tpu_custom_call.1} parent=1 // pred_check
      _
    $region7: #{tpu_custom_call.1} parent=1 // pred_check_branch
      %21 = sbr.rel (0) target = $region9
    $region8: #{tpu_custom_call.1} parent=1 // pred_region
      %22 = dma.done [#allocation4], 1536
    $region9: #{tpu_custom_call.1} parent=1 // pred_fallthru
      _
    %v23 = vld [vmem:[#allocation3] sm:$0xff]
    %v24 = vld [vmem:[#allocation3 + $0x8] sm:$0xff]
    %v25 = vld [vmem:[#allocation3 + $0x10] sm:$0xff]
    %v26 = vld [vmem:[#allocation3 + $0x18] sm:$0xff]
    %v27 = vld [vmem:[#allocation3 + $0x20] sm:$0xff]
    %v28 = vld [vmem:[#allocation3 + $0x28] sm:$0xff]
    %v29 = vld [vmem:[#allocation3 + $0x30] sm:$0xff]
    %v30 = vld [vmem:[#allocation3 + $0x38] sm:$0xff]
    %v31 = vld [vmem:[#allocation3 + $0x40] sm:$0xff]
    %v32 = vld [vmem:[#allocation3 + $0x48] sm:$0xff]
    %v33 = vld [vmem:[#allocation3 + $0x50] sm:$0xff]
    %v34 = vld [vmem:[#allocation3 + $0x58] sm:$0xff]
    %v35 = vrot.slane %v23, 4
    %v36 = vadd.f32 %v23, %v35
    %v37 = vrot.slane %v36, 2
    %v38 = vadd.f32 %v36, %v37
    %v39 = vrot.slane %v38, 1
    %v40 = vadd.f32 %v38, %v39
    %v41 = vrot.slane %v24, 4
    %v42 = vadd.f32 %v24, %v41
    %v43 = vrot.slane %v42, 2
    %v44 = vadd.f32 %v42, %v43
    %v45 = vrot.slane %v44, 1
    %v46 = vadd.f32 %v44, %v45
    %v47 = vrot.slane %v25, 4
    %v48 = vadd.f32 %v25, %v47
    %v49 = vrot.slane %v48, 2
    %v50 = vadd.f32 %v48, %v49
    %v51 = vrot.slane %v50, 1
    %v52 = vadd.f32 %v50, %v51
    %v53 = vrot.slane %v26, 4
    %v54 = vadd.f32 %v26, %v53
    %v55 = vrot.slane %v54, 2
    %v56 = vadd.f32 %v54, %v55
    %v57 = vrot.slane %v56, 1
    %v58 = vadd.f32 %v56, %v57
    %v59 = vrot.slane %v27, 4
    %v60 = vadd.f32 %v27, %v59
    %v61 = vrot.slane %v60, 2
    %v62 = vadd.f32 %v60, %v61
    %v63 = vrot.slane %v62, 1
    %v64 = vadd.f32 %v62, %v63
    %v65 = vrot.slane %v28, 4
    %v66 = vadd.f32 %v28, %v65
    %v67 = vrot.slane %v66, 2
    %v68 = vadd.f32 %v66, %v67
    %v69 = vrot.slane %v68, 1
    %v70 = vadd.f32 %v68, %v69
    %v71 = vrot.slane %v29, 4
    %v72 = vadd.f32 %v29, %v71
    %v73 = vrot.slane %v72, 2
    %v74 = vadd.f32 %v72, %v73
    %v75 = vrot.slane %v74, 1
    %v76 = vadd.f32 %v74, %v75
    %v77 = vrot.slane %v30, 4
    %v78 = vadd.f32 %v30, %v77
    %v79 = vrot.slane %v78, 2
    %v80 = vadd.f32 %v78, %v79
    %v81 = vrot.slane %v80, 1
    %v82 = vadd.f32 %v80, %v81
    %v83 = vrot.slane %v31, 4
    %v84 = vadd.f32 %v31, %v83
    %v85 = vrot.slane %v84, 2
    %v86 = vadd.f32 %v84, %v85
    %v87 = vrot.slane %v86, 1
    %v88 = vadd.f32 %v86, %v87
    %v89 = vrot.slane %v32, 4
    %v90 = vadd.f32 %v32, %v89
    %v91 = vrot.slane %v90, 2
    %v92 = vadd.f32 %v90, %v91
    %v93 = vrot.slane %v92, 1
    %v94 = vadd.f32 %v92, %v93
    %v95 = vrot.slane %v33, 4
    %v96 = vadd.f32 %v33, %v95
    %v97 = vrot.slane %v96, 2
    %v98 = vadd.f32 %v96, %v97
    %v99 = vrot.slane %v98, 1
    %v100 = vadd.f32 %v98, %v99
    %v101 = vrot.slane %v34, 4
    %v102 = vadd.f32 %v34, %v101
    %v103 = vrot.slane %v102, 2
    %v104 = vadd.f32 %v102, %v103
    %v105 = vrot.slane %v104, 1
    %v106 = vadd.f32 %v104, %v105
    %p107 = scmp.eq.s32.totalorder 0, 0
    // Predicated region
    $region10: #{tpu_custom_call.1} parent=1 // pred_check
      %p108 = pneg %p107
    $region11: #{tpu_custom_call.1} parent=1 // pred_check_branch
      %110 = sbr.rel (%p108) target = $region13
    $region12: #{tpu_custom_call.1} parent=1 // pred_region
      %v123 = vcombine.low %v40, %v46
      %v124 = vcombine.low %v52, %v58
      %v126 = vunpack.c.l.s4 1983009808
      %v127 = vunpack.c.0.s8 %v126
      %v128 = vlaneseq
      %v129 = vshrl.u32 %v128, 7
      %v130 = vsub.s32 %v127, %v129
      %v131 = vrot.slane %v123, %v130
      %v133 = vunpack.c.l.s4 1983009808
      %v134 = vunpack.c.0.s8 %v133
      %v135 = vlaneseq
      %v136 = vshrl.u32 %v135, 7
      %v137 = vsub.s32 %v134, %v136
      %v138 = vrot.slane %v124, %v137
      %v139 = vcombine.low %v131, %v138
      %v140 = vcombine.low %v64, %v70
      %v142 = vunpack.c.l.s4 1983009808
      %v143 = vunpack.c.0.s8 %v142
      %v144 = vlaneseq
      %v145 = vshrl.u32 %v144, 7
      %v146 = vsub.s32 %v143, %v145
      %v147 = vrot.slane %v140, %v146
      %v148 = vcombine.low %v76, %v82
      %v149 = vcombine.low %v88, %v94
      %v151 = vunpack.c.l.s4 1983009808
      %v152 = vunpack.c.0.s8 %v151
      %v153 = vlaneseq
      %v154 = vshrl.u32 %v153, 7
      %v155 = vsub.s32 %v152, %v154
      %v156 = vrot.slane %v148, %v155
      %v158 = vunpack.c.l.s4 1983009808
      %v159 = vunpack.c.0.s8 %v158
      %v160 = vlaneseq
      %v161 = vshrl.u32 %v160, 7
      %v162 = vsub.s32 %v159, %v161
      %v163 = vrot.slane %v149, %v162
      %v164 = vcombine.low %v156, %v163
      %v165 = vcombine.low %v100, %v106
      %v167 = vunpack.c.l.s4 1983009808
      %v168 = vunpack.c.0.s8 %v167
      %v169 = vlaneseq
      %v170 = vshrl.u32 %v169, 7
      %v171 = vsub.s32 %v168, %v170
      %v172 = vrot.slane %v165, %v171
      %vm173 = vcmask 1044484
      %v174 = vsel %vm173, %v139, %v139
      %vm175 = vcmask 1046534
      %v176 = vsel %vm175, %v139, %v174
      %v177 = vrot.slane %v164, 7
      %vm178 = vcmask 1041409
      %v179 = vsel %vm178, %v177, %v176
      %vm180 = vcmask 1043459
      %v181 = vsel %vm180, %v177, %v179
      %vm182 = vcmask 1045509
      %v183 = vsel %vm182, %v177, %v181
      %vm184 = vcmask 1047559
      %v185 = vsel %vm184, %v177, %v183
      %v186 = vsel %vm173, %v147, %v147
      %v187 = vsel %vm175, %v147, %v186
      %v188 = vrot.slane %v172, 7
      %v189 = vsel %vm178, %v188, %v187
      %v190 = vsel %vm180, %v188, %v189
      %v191 = vsel %vm182, %v188, %v190
      %v192 = vsel %vm184, %v188, %v191
      %195 = vst [vmem:[#allocation2] sm:$0xff] %v185
      %196 = vst [vmem:[#allocation2 + $0x8] sm:$0xf] %v192
    $region13: #{tpu_custom_call.1} parent=1 // pred_fallthru
      _
    %p197 = scmp.ne.s32.totalorder 0, 0
    // Predicated region
    $region14: #{tpu_custom_call.1} parent=1 // pred_check
      %p198 = pneg %p197
    $region15: #{tpu_custom_call.1} parent=1 // pred_check_branch
      %200 = sbr.rel (%p198) target = $region17
    $region16: #{tpu_custom_call.1} parent=1 // pred_region
      %v201 = vld [vmem:[#allocation2] sm:$0xff]
      %v202 = vld [vmem:[#allocation2 + $0x8] sm:$0xf]
      %v215 = vcombine.low %v40, %v46
      %v216 = vcombine.low %v52, %v58
      %v218 = vunpack.c.l.s4 1983009808
      %v219 = vunpack.c.0.s8 %v218
      %v220 = vlaneseq
      %v221 = vshrl.u32 %v220, 7
      %v222 = vsub.s32 %v219, %v221
      %v223 = vrot.slane %v215, %v222
      %v225 = vunpack.c.l.s4 1983009808
      %v226 = vunpack.c.0.s8 %v225
      %v227 = vlaneseq
      %v228 = vshrl.u32 %v227, 7
      %v229 = vsub.s32 %v226, %v228
      %v230 = vrot.slane %v216, %v229
      %v231 = vcombine.low %v223, %v230
      %v232 = vcombine.low %v64, %v70
      %v234 = vunpack.c.l.s4 1983009808
      %v235 = vunpack.c.0.s8 %v234
      %v236 = vlaneseq
      %v237 = vshrl.u32 %v236, 7
      %v238 = vsub.s32 %v235, %v237
      %v239 = vrot.slane %v232, %v238
      %v240 = vcombine.low %v76, %v82
      %v241 = vcombine.low %v88, %v94
      %v243 = vunpack.c.l.s4 1983009808
      %v244 = vunpack.c.0.s8 %v243
      %v245 = vlaneseq
      %v246 = vshrl.u32 %v245, 7
      %v247 = vsub.s32 %v244, %v246
      %v248 = vrot.slane %v240, %v247
      %v250 = vunpack.c.l.s4 1983009808
      %v251 = vunpack.c.0.s8 %v250
      %v252 = vlaneseq
      %v253 = vshrl.u32 %v252, 7
      %v254 = vsub.s32 %v251, %v253
      %v255 = vrot.slane %v241, %v254
      %v256 = vcombine.low %v248, %v255
      %v257 = vcombine.low %v100, %v106
      %v259 = vunpack.c.l.s4 1983009808
      %v260 = vunpack.c.0.s8 %v259
      %v261 = vlaneseq
      %v262 = vshrl.u32 %v261, 7
      %v263 = vsub.s32 %v260, %v262
      %v264 = vrot.slane %v257, %v263
      %vm265 = vcmask 1044484
      %v266 = vsel %vm265, %v231, %v231
      %vm267 = vcmask 1046534
      %v268 = vsel %vm267, %v231, %v266
      %v269 = vrot.slane %v256, 7
      %vm270 = vcmask 1041409
      %v271 = vsel %vm270, %v269, %v268
      %vm272 = vcmask 1043459
      %v273 = vsel %vm272, %v269, %v271
      %vm274 = vcmask 1045509
      %v275 = vsel %vm274, %v269, %v273
      %vm276 = vcmask 1047559
      %v277 = vsel %vm276, %v269, %v275
      %v278 = vsel %vm265, %v239, %v239
      %v279 = vsel %vm267, %v239, %v278
      %v280 = vrot.slane %v264, 7
      %v281 = vsel %vm270, %v280, %v279
      %v282 = vsel %vm272, %v280, %v281
      %v283 = vsel %vm274, %v280, %v282
      %v284 = vsel %vm276, %v280, %v283
      %v287 = vadd.f32 %v201, %v277
      %v288 = vadd.f32 %v202, %v284
      %289 = vst [vmem:[#allocation2] sm:$0xff] %v287
      %290 = vst [vmem:[#allocation2 + $0x8] sm:$0xf] %v288
    $region17: #{tpu_custom_call.1} parent=1 // pred_fallthru
      _
    // Predicated region
    $region18: #{tpu_custom_call.1} parent=1 // pred_check
      %p291 = pneg %p107
    $region19: #{tpu_custom_call.1} parent=1 // pred_check_branch
      %293 = sbr.rel (%p291) target = $region21
    $region20: #{tpu_custom_call.1} parent=1 // pred_region
      %v294 = vld [vmem:[#allocation2] sm:$0xff]
      %v295 = vld [vmem:[#allocation2 + $0x8] sm:$0xf]
      %v296 = vmul.f32 %v294, 0.125
      %v297 = vmul.f32 %v295, 0.125
      %298 = vst [vmem:[#allocation6] sm:$0xff] %v296
      %299 = vst [vmem:[#allocation6 + $0x8] sm:$0xf] %v297
    $region21: #{tpu_custom_call.1} parent=1 // pred_fallthru
      _
    // Predicated region
    $region22: #{tpu_custom_call.1} parent=1 // pred_check
      _
    $region23: #{tpu_custom_call.1} parent=1 // pred_check_branch
      %301 = sbr.rel (0) target = $region25
    $region24: #{tpu_custom_call.1} parent=1 // pred_region
      %s303 = ssub.s32 192, 192
      %304 = vsyncadd [#allocation5], %s303
      %s306 = sshll.u32 [#allocation6], 4
      %s307 = int_to_ptr.vmem [resolvable:$true] %s306
      %309 = dma.vmem_to_hbm [thread:$0]  %s307, 192, %s1, [#allocation5]
    $region25: #{tpu_custom_call.1} parent=1 // pred_fallthru
      _
    // Predicated region
    $region26: #{tpu_custom_call.1} parent=1 // pred_check
      _
    $region27: #{tpu_custom_call.1} parent=1 // pred_check_branch
      %311 = sbr.rel (0) target = $region29
    $region28: #{tpu_custom_call.1} parent=1 // pred_region
      %312 = dma.done [#allocation5], 192
    $region29: #{tpu_custom_call.1} parent=1 // pred_fallthru
      _
    %313 = vsyncpa [#allocation4], 1
    %314 = vsyncpa [#allocation5], 1

</llo_original>
